<compile_context>
chip_gen: v7x
topology: tpu7x:2x2x1
jax: 0.10.0
libtpu: 0.0.40
codegen_flags: <defaults>
</compile_context>

<pallas_src>
import functools

import jax
import jax.numpy as jnp
from jax.experimental import pallas as pl
from jax.experimental.pallas import tpu as pltpu


# ----------------------------- Pallas kernel -----------------------------

def _propagate_kernel(adj_ref, x_ref, o_ref):
    """One (tm, D) output stripe of adj @ x with x fully VMEM-resident."""
    o_ref[...] = jnp.dot(
        adj_ref[...], x_ref[...], preferred_element_type=jnp.float32
    ).astype(o_ref.dtype)


def _round_up(v, m):
    return (v + m - 1) // m * m


# Conservative budgets so one tiling works on v5e/v6e (128 MiB VMEM) and on
# v7x (64 MiB VMEM) without spilling; leaves headroom for compiler scratch.
_VMEM_LIMIT_BYTES = 48 * 1024 * 1024
_TILE_BUDGET_BYTES = 36 * 1024 * 1024


def _choose_tm(tm, m, k_pad, d, adj_bytes, x_bytes, out_bytes):
    """Largest row-stripe height whose (double-buffered) tiles fit the budget."""
    tm_eff = min(tm, _round_up(m, 8))
    while tm_eff > 8:
        need = (2 * tm_eff * k_pad * adj_bytes    # double-buffered adj stripe
                + 2 * k_pad * d * x_bytes         # resident x (counted x2 to be safe)
                + 2 * tm_eff * d * out_bytes)     # output stripe
        if need <= _TILE_BUDGET_BYTES:
            break
        tm_eff = max(8, _round_up(tm_eff // 2, 8))
    return tm_eff


@functools.partial(jax.jit, static_argnames=("tm",))
def propagate_once(adj, x, *, tm=512):
    """adj @ x (f32 result) via a Pallas kernel: bf16 MXU inputs, f32 accumulation."""
    m, k = adj.shape
    k2, d = x.shape
    assert k == k2, (adj.shape, x.shape)

    # bf16 halves the dominant HBM stream (adj) on every generation; MXU takes
    # bf16 natively and preferred_element_type keeps f32 accumulation.
    adj = adj.astype(jnp.bfloat16)
    x = x.astype(jnp.bfloat16)

    k_pad = _round_up(k, 128)
    tm_eff = _choose_tm(tm, m, k_pad, d,
                        adj.dtype.itemsize, x.dtype.itemsize, 4)
    m_pad = _round_up(m, tm_eff)

    if m_pad != m or k_pad != k:
        adj = jnp.pad(adj, ((0, m_pad - m), (0, k_pad - k)))
    if k_pad != k:
        x = jnp.pad(x, ((0, k_pad - k), (0, 0)))

    out = pl.pallas_call(
        _propagate_kernel,
        out_shape=jax.ShapeDtypeStruct((m_pad, d), jnp.float32),
        grid_spec=pltpu.PrefetchScalarGridSpec(
            num_scalar_prefetch=0,
            grid=(m_pad // tm_eff,),
            in_specs=[
                pl.BlockSpec((tm_eff, k_pad), lambda i: (i, 0)),  # adj row stripe
                pl.BlockSpec((k_pad, d), lambda i: (0, 0)),       # VMEM-resident x
            ],
            out_specs=pl.BlockSpec((tm_eff, d), lambda i: (i, 0)),
        ),
        compiler_params=pltpu.CompilerParams(
            dimension_semantics=("parallel",),   # shards M stripes across v7x's 2 TCs
            vmem_limit_bytes=_VMEM_LIMIT_BYTES,
        ),
    )(adj, x)
    return out[:m]


# ----------------------------- LightGCN (JAX) -----------------------------

class LightGCN:
    """JAX/Pallas port of the LightGCN forward pass."""

    def __init__(self, n_users, n_items, adj, emb_size, layers, key):
        self.n_users = n_users
        self.n_items = n_items
        self.emb_size = emb_size
        self.layers = layers
        self.adj = adj
        ku, ki = jax.random.split(key)
        # nn.init.normal_(std=0.01) equivalent, deterministic
        self.user_embeddings = 0.01 * jax.random.normal(
            ku, (n_users, emb_size), dtype=jnp.float32
        )
        self.item_embeddings = 0.01 * jax.random.normal(
            ki, (n_items, emb_size), dtype=jnp.float32
        )

    def forward(self, adj):
        # x = cat([user_emb, item_emb], dim=0)
        x = jnp.concatenate([self.user_embeddings, self.item_embeddings], axis=0)
        all_emb = [x]
        nu = self.n_users

        # LightGCN adjacencies are bipartite (no self loops): the (user,user) and
        # (item,item) quadrants are all-zero, so skip their HBM traffic entirely.
        try:
            bipartite = (not bool(jnp.any(adj[:nu, :nu] != 0))
                         and not bool(jnp.any(adj[nu:, nu:] != 0)))
        except jax.errors.ConcretizationTypeError:
            bipartite = False  # adj is a tracer; fall back to the general path

        if bipartite:
            a_ui = adj[:nu, nu:]   # users  <- items
            a_iu = adj[nu:, :nu]   # items  <- users
            for _ in range(self.layers):
                xu = propagate_once(a_ui, x[nu:])
                xi = propagate_once(a_iu, x[:nu])
                x = jnp.concatenate([xu, xi], axis=0)
                all_emb.append(x)
        else:
            for _ in range(self.layers):
                x = propagate_once(adj, x)   # Pallas kernel: adj @ x
                all_emb.append(x)
        return all_emb

    def fusion(self, embeddings):
        embeddings = jnp.stack(embeddings, axis=1)
        return jnp.mean(embeddings, axis=1)

    def split_emb(self, embeddings):
        return embeddings[: self.n_users], embeddings[self.n_users:]


# ----------------------------- helpers -----------------------------

def build_normalized_adj(n_users, n_items, key):
    """Synthetic symmetric-normalized bipartite adjacency (densified)."""
    n = n_users + n_items
    inter = jax.random.bernoulli(key, p=0.05, shape=(n_users, n_items)).astype(
        jnp.float32
    )
    a = jnp.zeros((n, n), dtype=jnp.float32)
    a = a.at[:n_users, n_users:].set(inter)
    a = a.at[n_users:, :n_users].set(inter.T)
    deg = jnp.sum(a, axis=1)
    d_inv_sqrt = jnp.where(deg > 0, 1.0 / jnp.sqrt(jnp.maximum(deg, 1e-12)), 0.0)
    return a * d_inv_sqrt[:, None] * d_inv_sqrt[None, :]


def _ref_propagate(adj, x):
    """Reference for one layer with the same bf16-in / f32-accumulate recipe."""
    return jnp.dot(adj.astype(jnp.bfloat16), x.astype(jnp.bfloat16),
                   preferred_element_type=jnp.float32)


# ----------------------------- main -----------------------------

if __name__ == "__main__":
    key = jax.random.PRNGKey(0)
    k_adj, k_emb = jax.random.split(key)

    n_users, n_items, emb_size, n_layers = 48, 80, 32, 2  # N = 128
    adj = build_normalized_adj(n_users, n_items, k_adj)

    model = LightGCN(n_users, n_items, adj, emb_size, n_layers, k_emb)

    all_emb = model.forward(adj)          # list of (N, D), length layers + 1
    fused = model.fusion(all_emb)         # (N, D)
    user_emb, item_emb = model.split_emb(fused)

    jax.block_until_ready((all_emb, fused, user_emb, item_emb))

    # Reference check: mirror the forward exactly with plain XLA matmuls
    # (same bf16 inputs / f32 accumulation, same bipartite split).
    x0 = jnp.concatenate([model.user_embeddings, model.item_embeddings], axis=0)
    a_ui = adj[:n_users, n_users:]
    a_iu = adj[n_users:, :n_users]
    ref = [x0]
    xr = x0
    for _ in range(n_layers):
        xu = _ref_propagate(a_ui, xr[n_users:])
        xi = _ref_propagate(a_iu, xr[:n_users])
        xr = jnp.concatenate([xu, xi], axis=0)
        ref.append(xr)

    for got, want in zip(all_emb, ref):
        assert jnp.allclose(got, want, atol=1e-5, rtol=1e-3), (
            float(jnp.max(jnp.abs(got - want))))

    print("KERNEL_OK")
</pallas_src>

<mosaic_0001>
module attributes {stable_mosaic.version = 11 : i64} {
  func.func @_propagate_kernel(%arg0: i32, %arg1: memref<48x128xbf16, #tpu.memory_space<vmem>>, %arg2: memref<128x32xbf16, #tpu.memory_space<vmem>>, %arg3: memref<48x32xf32, #tpu.memory_space<vmem>>) attributes {dimension_semantics = [#tpu.dimension_semantics<parallel>], iteration_bounds = array<i64: 1>, scalar_prefetch = 0 : i64, scratch_operands = 0 : i64, tpu.core_type = #tpu.core_type<tc>, window_params = [{transform_indices = @transform_0, window_bounds = array<i64: 48, 128>}, {pipeline_mode = #tpu.pipeline_mode<synchronous>, transform_indices = @transform_1, window_bounds = array<i64: 128, 32>}, {transform_indices = @transform_2, window_bounds = array<i64: 48, 32>}]} {
    %c0 = arith.constant 0 : index
    %c0_0 = arith.constant 0 : index
    %0 = vector.load %arg1[%c0, %c0_0] : memref<48x128xbf16, #tpu.memory_space<vmem>>, vector<48x128xbf16>
    %c0_1 = arith.constant 0 : index
    %c0_2 = arith.constant 0 : index
    %1 = vector.load %arg2[%c0_1, %c0_2] : memref<128x32xbf16, #tpu.memory_space<vmem>>, vector<128x32xbf16>
    %cst = arith.constant dense<0.000000e+00> : vector<48x32xf32>
    %2 = tpu.matmul %0, %1, %cst {dimension_numbers = #tpu.dot_dimension_numbers<[1], [0], [0], [1], [0, 0, 1, 1], [], []>} : vector<48x128xbf16>, vector<128x32xbf16>, vector<48x32xf32> -> vector<48x32xf32>
    %c0_3 = arith.constant 0 : index
    %c0_4 = arith.constant 0 : index
    %3 = vector.load %arg3[%c0_3, %c0_4] : memref<48x32xf32, #tpu.memory_space<vmem>>, vector<48x32xf32>
    tpu.vector_store %arg3[%c0_3, %c0_4], %2 {strides = array<i32>} : memref<48x32xf32, #tpu.memory_space<vmem>>, vector<48x32xf32>,
    return
  }
  func.func @transform_0(%arg0: i32) -> (i32, i32) {
    %c0_i32 = arith.constant 0 : i32
    %c0_i32_0 = arith.constant 0 : i32
    return %arg0, %c0_i32 : i32, i32
  }
  func.func @transform_1(%arg0: i32) -> (i32, i32) {
    %c0_i32 = arith.constant 0 : i32
    %c0_i32_0 = arith.constant 0 : i32
    %c0_i32_1 = arith.constant 0 : i32
    return %c0_i32, %c0_i32_0 : i32, i32
  }
  func.func @transform_2(%arg0: i32) -> (i32, i32) {
    %c0_i32 = arith.constant 0 : i32
    %c0_i32_0 = arith.constant 0 : i32
    return %arg0, %c0_i32 : i32, i32
  }
}

</mosaic_0001>

<llo_original>
// kernel: propagate_once.1
$region0: #{propagate_once.1}
  #allocation0 [shape = 'u32[]', space=smem, size = 0x4, offset = 0x4, fixed_abs, tag = 'smem constant byte address 0x4 - core index']
  #allocation1 [shape = 'u32[144,128]{1,0:T(1,128)}', space=vmem, size = 0x12000, scoped, tag = 'internal scratch']
  %s0 = inlined_call_operand.vmem [shape: bf16[48,128], index: 0, kind: input, shape index: {}]
  %s1 = inlined_call_operand.vmem [shape: bf16[128,32], index: 1, kind: input, shape index: {}]
  %s2 = inlined_call_operand.vmem [shape: f32[48,32], index: 2, kind: output, shape index: {}]
  %s3 = sld [smem:[#allocation0]]
  $region18: #{propagate_once.1} parent=0
    _
  %s5 = ssub.s32 1, %s3
  %s6 = scalar_select 0, %s5, %s3
  // Predicated region
  $region2: #{propagate_once.1} parent=0 // pred_check
    _
  $region3: #{propagate_once.1} parent=0 // pred_check_branch
    %8 = sbr.rel (0) target = $region5
  $region4: #{propagate_once.1} parent=0 // pred_region
    _
  $region5: #{propagate_once.1} parent=0 // pred_fallthru
    _
  // Predicated region
  $region6: #{propagate_once.1} parent=0 // pred_check
    _
  $region7: #{propagate_once.1} parent=0 // pred_check_branch
    %10 = sbr.rel (0) target = $region9
  $region8: #{propagate_once.1} parent=0 // pred_region
    _
  $region9: #{propagate_once.1} parent=0 // pred_fallthru
    _
  %v12 = vld [vmem:[%s0] sm:$0xf]
  %v13 = vld [vmem:[%s0 + $0x4] sm:$0xf]
  %v14 = vld [vmem:[%s0 + $0x8] sm:$0xf]
  %v15 = vld [vmem:[%s0 + $0xc] sm:$0xf]
  %v16 = vld [vmem:[%s0 + $0x10] sm:$0xf]
  %v17 = vld [vmem:[%s0 + $0x14] sm:$0xf]
  %v18 = vld [vmem:[%s1] sm:$0xf]
  %v19 = vld [vmem:[%s1 + $0x4] sm:$0xf]
  %v20 = vld [vmem:[%s1 + $0x8] sm:$0xf]
  %v21 = vld [vmem:[%s1 + $0xc] sm:$0xf]
  %v22 = vld [vmem:[%s1 + $0x10] sm:$0xf]
  %v23 = vld [vmem:[%s1 + $0x14] sm:$0xf]
  %v24 = vld [vmem:[%s1 + $0x18] sm:$0xf]
  %v25 = vld [vmem:[%s1 + $0x1c] sm:$0xf]
  %v26 = vld [vmem:[%s1 + $0x20] sm:$0xf]
  %v27 = vld [vmem:[%s1 + $0x24] sm:$0xf]
  %v28 = vld [vmem:[%s1 + $0x28] sm:$0xf]
  %v29 = vld [vmem:[%s1 + $0x2c] sm:$0xf]
  %v30 = vld [vmem:[%s1 + $0x30] sm:$0xf]
  %v31 = vld [vmem:[%s1 + $0x34] sm:$0xf]
  %v32 = vld [vmem:[%s1 + $0x38] sm:$0xf]
  %v33 = vld [vmem:[%s1 + $0x3c] sm:$0xf]
  %v40 = vunpack.c.l.b16 %v12
  %v41 = vunpack.c.l.b16 %v13
  %v42 = vunpack.c.l.b16 %v14
  %v43 = vunpack.c.l.b16 %v15
  %v44 = vunpack.c.l.b16 %v16
  %v45 = vunpack.c.l.b16 %v17
  %v46 = vpack.c.b16 %v41, %v40
  %v47 = vpack.c.b16 %v43, %v42
  %v48 = vpack.c.b16 %v45, %v44
  %v68 = vunpack.c.l.b16 %v18
  %v69 = vunpack.c.l.b16 %v19
  %v70 = vunpack.c.l.b16 %v20
  %v71 = vunpack.c.l.b16 %v21
  %v72 = vunpack.c.l.b16 %v22
  %v73 = vunpack.c.l.b16 %v23
  %v74 = vunpack.c.l.b16 %v24
  %v75 = vunpack.c.l.b16 %v25
  %v76 = vunpack.c.l.b16 %v26
  %v77 = vunpack.c.l.b16 %v27
  %v78 = vunpack.c.l.b16 %v28
  %v79 = vunpack.c.l.b16 %v29
  %v80 = vunpack.c.l.b16 %v30
  %v81 = vunpack.c.l.b16 %v31
  %v82 = vunpack.c.l.b16 %v32
  %v83 = vunpack.c.l.b16 %v33
  %v84 = vpack.c.b16 %v69, %v68
  %v85 = vpack.c.b16 %v71, %v70
  %v86 = vpack.c.b16 %v73, %v72
  %v87 = vpack.c.b16 %v75, %v74
  %v88 = vpack.c.b16 %v77, %v76
  %v89 = vpack.c.b16 %v79, %v78
  %v90 = vpack.c.b16 %v81, %v80
  %v91 = vpack.c.b16 %v83, %v82
  %100 = vmatprep.subr.bf16.mxu0 0
  %101 = vmatpush1.bf16.msra.mxu0 %v84
  %102 = vmatprep.subr.bf16.mxu0 0
  %103 = vmatpush1.bf16.msra.mxu0 %v85
  %104 = vmatprep.subr.bf16.mxu0 0
  %105 = vmatpush1.bf16.msra.mxu0 %v86
  %106 = vmatprep.subr.bf16.mxu0 0
  %107 = vmatpush1.bf16.msra.mxu0 %v87
  %108 = vmatprep.subr.bf16.mxu0 0
  %109 = vmatpush1.bf16.msra.mxu0 %v88
  %110 = vmatprep.subr.bf16.mxu0 0
  %111 = vmatpush1.bf16.msra.mxu0 %v89
  %112 = vmatprep.subr.bf16.mxu0 0
  %113 = vmatpush1.bf16.msra.mxu0 %v90
  %114 = vmatprep.subr.bf16.mxu0 0
  %115 = vmatpush1.bf16.msra.mxu0 %v91
  %116 = vmatprep.subr.bf16.mxu0 0
  %117 = vmatpush1.bf16.msra.mxu0 0
  %118 = vmatprep.subr.bf16.mxu0 0
  %119 = vmatpush1.bf16.msra.mxu0 0
  %120 = vmatprep.subr.bf16.mxu0 0
  %121 = vmatpush1.bf16.msra.mxu0 0
  %122 = vmatprep.subr.bf16.mxu0 0
  %123 = vmatpush1.bf16.msra.mxu0 0
  %124 = vmatprep.subr.bf16.mxu0 0
  %125 = vmatpush1.bf16.msra.mxu0 0
  %126 = vmatprep.subr.bf16.mxu0 0
  %127 = vmatpush1.bf16.msra.mxu0 0
  %128 = vmatprep.subr.bf16.mxu0 0
  %129 = vmatpush1.bf16.msra.mxu0 0
  %130 = vmatprep.subr.bf16.mxu0 0
  %131 = vmatpush1.bf16.msra.mxu0 0
  %132 = vmatprep.mubr.bf16.mxu0 0
  %133 = vmatmul.mubr.bf16.gmra.mrb[0].mxu0 %v46
  %v134 = vpop.f32.mrb[0].mxu0
  %v135 = vadd.f32 0.0, %v134
  %v136 = vpop.f32.mrb[0].mxu0
  %v137 = vpop.f32.mrb[0].mxu0
  %v138 = vadd.f32 0.0, %v137
  %v139 = vpop.f32.mrb[0].mxu0
  %140 = vmatprep.mubr.bf16.mxu0 0
  %141 = vmatmul.mubr.bf16.gmra.mrb[0].mxu0 %v47
  %v142 = vpop.f32.mrb[0].mxu0
  %v143 = vadd.f32 0.0, %v142
  %v144 = vpop.f32.mrb[0].mxu0
  %v145 = vpop.f32.mrb[0].mxu0
  %v146 = vadd.f32 0.0, %v145
  %v147 = vpop.f32.mrb[0].mxu0
  %148 = vmatprep.mubr.bf16.mxu0 0
  %149 = vmatmul.mubr.bf16.gmra.mrb[0].mxu0 %v48
  %v150 = vpop.f32.mrb[0].mxu0
  %v151 = vadd.f32 0.0, %v150
  %v152 = vpop.f32.mrb[0].mxu0
  %v153 = vpop.f32.mrb[0].mxu0
  %v154 = vadd.f32 0.0, %v153
  %v155 = vpop.f32.mrb[0].mxu0
  %156 = vdwg.mxu0
  %vm157 = vcmask 261120
  %158 = vst.msk [vmem:[%s2] sm:$0xff] %vm157, %v135
  %159 = vst.msk [vmem:[%s2 + $0x8] sm:$0xff] %vm157, %v138
  %160 = vst.msk [vmem:[%s2 + $0x10] sm:$0xff] %vm157, %v143
  %161 = vst.msk [vmem:[%s2 + $0x18] sm:$0xff] %vm157, %v146
  %162 = vst.msk [vmem:[%s2 + $0x20] sm:$0xff] %vm157, %v151
  %163 = vst.msk [vmem:[%s2 + $0x28] sm:$0xff] %vm157, %v154
  // Predicated region
  $region10: #{propagate_once.1} parent=0 // pred_check
    _
  $region11: #{propagate_once.1} parent=0 // pred_check_branch
    %165 = sbr.rel (0) target = $region13
  $region12: #{propagate_once.1} parent=0 // pred_region
    _
  $region13: #{propagate_once.1} parent=0 // pred_fallthru
    _
  // Predicated region
  $region14: #{propagate_once.1} parent=0 // pred_check
    _
  $region15: #{propagate_once.1} parent=0 // pred_check_branch
    %167 = sbr.rel (0) target = $region17
  $region16: #{propagate_once.1} parent=0 // pred_region
    _
  $region17: #{propagate_once.1} parent=0 // pred_fallthru
    _

</llo_original>
